<compile_context>
chip_gen: v6e
topology: v6e:2x2x1
jax: 0.10.0
libtpu: 0.0.40
codegen_flags: <defaults>
</compile_context>

<pallas_src>
import jax
import jax.numpy as jnp
from jax import lax
from jax.experimental import pallas as pl
from jax.experimental.pallas import tpu as pltpu


def _mlp_kernel(x_ref, w1t_ref, w2_ref, o_ref):
    # x_ref:   (tb, in_size)      input rows, true (unpadded) feature dim
    # w1t_ref: (in_size, hid_p)   layer-1 weight, pre-transposed to (K, N)
    # w2_ref:  (out_size, hid_p)  layer-2 weight, PyTorch (out, hid) layout
    # o_ref:   (out_size, tb)     output, batch on the lane axis (lane-dense)
    x = x_ref[...]
    w1t = w1t_ref[...]
    w2 = w2_ref[...]

    # Layer 1: x @ w1.T == x @ w1t — canonical (M,K)x(K,N) MXU feed.
    h = lax.dot_general(
        x, w1t,
        dimension_numbers=(((1,), (0,)), ((), ())),
        preferred_element_type=jnp.float32,
    )
    # tanh (EUP) and square (VPU) in float32.
    h = jnp.tanh(h)
    h = h * h

    # Layer 2, transposed: out[o, b] = sum_h w2[o, h] * hsq[b, h]
    # (contract last dims of both operands; batch lands on the lane axis).
    out = lax.dot_general(
        w2, h.astype(w2.dtype),
        dimension_numbers=(((1,), (1,)), ((), ())),
        preferred_element_type=jnp.float32,
    )
    o_ref[...] = out.astype(o_ref.dtype)


def _round_up(n, m):
    return ((n + m - 1) // m) * m


def make_neural_network_forward(w1, w2, *, tile_b=2048, matmul_dtype=jnp.float32):
    """Build a jitted forward(x) equivalent to NeuralNetwork.forward.

    w1: (hid_neurons, input_size) float32   (nn.Linear weight layout)
    w2: (output_size, hid_neurons) float32
    forward(x): (B, input_size) -> (B, output_size) float32
    """
    w1 = jnp.asarray(w1, jnp.float32)
    w2 = jnp.asarray(w2, jnp.float32)
    hid, in_size = w1.shape
    out_size, hid2 = w2.shape
    assert hid2 == hid, (w1.shape, w2.shape)

    # One-time weight prep (hoisted out of the per-call path). Zero-padding the
    # hidden dim to a lane multiple is semantics-preserving: tanh(0)^2 == 0 and
    # zero w2 columns contribute nothing.
    hid_p = _round_up(hid, 128)
    w1t_p = jnp.zeros((in_size, hid_p), jnp.float32).at[:, :hid].set(w1.T)
    w2_p = jnp.zeros((out_size, hid_p), jnp.float32).at[:, :hid].set(w2)
    w1t_p = w1t_p.astype(matmul_dtype)
    w2_p = w2_p.astype(matmul_dtype)

    tile_b_eff = max(128, _round_up(tile_b, 128))

    def _choose_tile(batch):
        if batch <= 256:
            # Single tile; full-array-dim blocks have no (8,128) constraint.
            return batch
        # Multiple of 128 (lane-dense output tiles + aligned sublanes) and at
        # least 2 grid steps when possible so "parallel" shards across v7x TCs.
        return min(tile_b_eff, _round_up(pl.cdiv(batch, 2), 128))

    @jax.jit
    def forward(x):
        x = jnp.asarray(x, jnp.float32)
        batch, xf = x.shape
        assert xf == in_size, (x.shape, in_size)
        tb = _choose_tile(batch)
        grid = (pl.cdiv(batch, tb),)

        out_t = pl.pallas_call(
            _mlp_kernel,
            out_shape=jax.ShapeDtypeStruct((out_size, batch), jnp.float32),
            grid=grid,
            in_specs=[
                pl.BlockSpec((tb, in_size), lambda i: (i, 0)),       # x: batch-tiled
                pl.BlockSpec((in_size, hid_p), lambda i: (0, 0)),    # w1t: grid-invariant
                pl.BlockSpec((out_size, hid_p), lambda i: (0, 0)),   # w2: grid-invariant
            ],
            out_specs=pl.BlockSpec((out_size, tb), lambda i: (0, i)),  # lane-dense over batch
            compiler_params=pltpu.CompilerParams(
                dimension_semantics=("parallel",),
            ),
        )(x.astype(matmul_dtype), w1t_p, w2_p)

        # (out_size, B) -> (B, out_size); free for out_size == 1.
        return out_t.T

    return forward


def neural_network_forward(x, w1, w2, **kwargs):
    """Convenience one-shot wrapper (prefer make_neural_network_forward for reuse)."""
    return make_neural_network_forward(w1, w2, **kwargs)(x)


if __name__ == "__main__":
    # Small shapes consistent with the module: input_size=4, hid_neurons=32,
    # output_size=1, batch=8.
    input_size = 4
    hid_neurons = 32
    output_size = 1
    batch = 8

    key = jax.random.PRNGKey(0)
    kx, kw1, kw2 = jax.random.split(key, 3)

    x = jax.random.normal(kx, (batch, input_size), dtype=jnp.float32)
    w1 = jax.random.normal(kw1, (hid_neurons, input_size), dtype=jnp.float32) * 0.5
    w2 = jax.random.normal(kw2, (output_size, hid_neurons), dtype=jnp.float32) * 0.5

    forward = make_neural_network_forward(w1, w2)
    out = jax.block_until_ready(forward(x))

    # Reference in plain JAX (mirrors the PyTorch forward exactly).
    ref = jnp.square(jnp.tanh(x @ w1.T)) @ w2.T
    assert out.shape == (batch, output_size), out.shape
    assert jnp.allclose(out, ref, atol=1e-5, rtol=1e-5), jnp.max(jnp.abs(out - ref))

    print("KERNEL_OK")
</pallas_src>

<mosaic_0001>
module attributes {stable_mosaic.version = 11 : i64} {
  func.func @_mlp_kernel(%arg0: i32, %arg1: memref<8x4xf32, #tpu.memory_space<vmem>>, %arg2: memref<4x128xf32, #tpu.memory_space<vmem>>, %arg3: memref<1x128xf32, #tpu.memory_space<vmem>>, %arg4: memref<1x8xf32, #tpu.memory_space<vmem>>) attributes {dimension_semantics = [#tpu.dimension_semantics<parallel>], iteration_bounds = array<i64: 1>, scalar_prefetch = 0 : i64, scratch_operands = 0 : i64, tpu.core_type = #tpu.core_type<tc>, window_params = [{transform_indices = @transform_0, window_bounds = array<i64: 8, 4>}, {pipeline_mode = #tpu.pipeline_mode<synchronous>, transform_indices = @transform_1, window_bounds = array<i64: 4, 128>}, {pipeline_mode = #tpu.pipeline_mode<synchronous>, transform_indices = @transform_2, window_bounds = array<i64: 1, 128>}, {transform_indices = @transform_3, window_bounds = array<i64: 1, 8>}]} {
    %c0 = arith.constant 0 : index
    %c0_0 = arith.constant 0 : index
    %0 = vector.load %arg1[%c0, %c0_0] : memref<8x4xf32, #tpu.memory_space<vmem>>, vector<8x4xf32>
    %c0_1 = arith.constant 0 : index
    %c0_2 = arith.constant 0 : index
    %1 = vector.load %arg2[%c0_1, %c0_2] : memref<4x128xf32, #tpu.memory_space<vmem>>, vector<4x128xf32>
    %c0_3 = arith.constant 0 : index
    %c0_4 = arith.constant 0 : index
    %2 = vector.load %arg3[%c0_3, %c0_4] : memref<1x128xf32, #tpu.memory_space<vmem>>, vector<1x128xf32>
    %cst = arith.constant dense<0.000000e+00> : vector<8x128xf32>
    %3 = tpu.matmul %0, %1, %cst {dimension_numbers = #tpu.dot_dimension_numbers<[1], [0], [0], [1], [0, 0, 1, 1], [], []>} : vector<8x4xf32>, vector<4x128xf32>, vector<8x128xf32> -> vector<8x128xf32>
    %4 = math.tanh %3 : vector<8x128xf32>
    %5 = arith.mulf %4, %4 : vector<8x128xf32>
    %cst_5 = arith.constant dense<0.000000e+00> : vector<1x8xf32>
    %6 = tpu.matmul %2, %5, %cst_5 {dimension_numbers = #tpu.dot_dimension_numbers<[1], [1], [0], [0], [0, 0, 1, 0], [], []>} : vector<1x128xf32>, vector<8x128xf32>, vector<1x8xf32> -> vector<1x8xf32>
    %c0_6 = arith.constant 0 : index
    %c0_7 = arith.constant 0 : index
    %7 = vector.load %arg4[%c0_6, %c0_7] : memref<1x8xf32, #tpu.memory_space<vmem>>, vector<1x8xf32>
    tpu.vector_store %arg4[%c0_6, %c0_7], %6 {strides = array<i32>} : memref<1x8xf32, #tpu.memory_space<vmem>>, vector<1x8xf32>,
    return
  }
  func.func @transform_0(%arg0: i32) -> (i32, i32) {
    %c0_i32 = arith.constant 0 : i32
    %c0_i32_0 = arith.constant 0 : i32
    return %arg0, %c0_i32 : i32, i32
  }
  func.func @transform_1(%arg0: i32) -> (i32, i32) {
    %c0_i32 = arith.constant 0 : i32
    %c0_i32_0 = arith.constant 0 : i32
    %c0_i32_1 = arith.constant 0 : i32
    return %c0_i32, %c0_i32_0 : i32, i32
  }
  func.func @transform_2(%arg0: i32) -> (i32, i32) {
    %c0_i32 = arith.constant 0 : i32
    %c0_i32_0 = arith.constant 0 : i32
    %c0_i32_1 = arith.constant 0 : i32
    return %c0_i32, %c0_i32_0 : i32, i32
  }
  func.func @transform_3(%arg0: i32) -> (i32, i32) {
    %c0_i32 = arith.constant 0 : i32
    %c0_i32_0 = arith.constant 0 : i32
    return %c0_i32, %arg0 : i32, i32
  }
}

</mosaic_0001>

<llo_original>
// kernel: forward.1
$region0: #{forward.1}
  #allocation0 [shape = 'u32[]', space=smem, size = 0x4, offset = 0x4, fixed_abs, tag = 'smem constant byte address 0x4 - core index']
  #allocation1 [shape = 'u32[144,128]{1,0:T(1,128)}', space=vmem, size = 0x12000, scoped, tag = 'internal scratch']
  %s0 = inlined_call_operand.vmem [shape: f32[8,4], index: 0, kind: input, shape index: {}]
  %s1 = inlined_call_operand.vmem [shape: f32[4,128], index: 1, kind: input, shape index: {}]
  %s2 = inlined_call_operand.vmem [shape: f32[1,128], index: 2, kind: input, shape index: {}]
  %s3 = inlined_call_operand.hbm [shape: f32[1,8], index: 3, kind: output, shape index: {}]
  %s4 = sld [smem:[#allocation0]]
  $region22: #{forward.1} parent=0
    _
  %s6 = ssub.s32 1, %s4
  %s7 = scalar_select 0, %s6, %s4
  $region1: #{forward.1} parent=0
    #allocation2 [shape = 'u8[512]{0}', space=vmem, size = 0x400, scoped, tag = 'output window, operand 0, single buffered']
    #allocation3 [shape = 's32[1]{0}', space=sflag, size = 0x4, scoped, tag = 'scoped memory for forward.1']
    %8 = vsyncpa [#allocation3], 0
    // Predicated region
    $region2: #{forward.1} parent=1 // pred_check
      _
    $region3: #{forward.1} parent=1 // pred_check_branch
      %10 = sbr.rel (0) target = $region5
    $region4: #{forward.1} parent=1 // pred_region
      _
    $region5: #{forward.1} parent=1 // pred_fallthru
      _
    // Predicated region
    $region6: #{forward.1} parent=1 // pred_check
      _
    $region7: #{forward.1} parent=1 // pred_check_branch
      %12 = sbr.rel (0) target = $region9
    $region8: #{forward.1} parent=1 // pred_region
      _
    $region9: #{forward.1} parent=1 // pred_fallthru
      _
    // Predicated region
    $region10: #{forward.1} parent=1 // pred_check
      _
    $region11: #{forward.1} parent=1 // pred_check_branch
      %14 = sbr.rel (0) target = $region13
    $region12: #{forward.1} parent=1 // pred_region
      _
    $region13: #{forward.1} parent=1 // pred_fallthru
      _
    %v15 = vld [vmem:[%s0] sm:$0xff]
    %v16 = vld [vmem:[%s1] sm:$0xf]
    %v17 = vld [vmem:[%s2] sm:$0x1]
    %vm18 = vcmask 31744
    %v20 = vsel %vm18, %v15, 0
    %vm22 = vcmask 1043456
    %v24 = vsel %vm22, %v16, 0
    %26 = vmatprep.subr.mxu0 0.0
    %27 = vmatpush1.msra.mxu0 0.0
    %28 = vmatprep.subr.mxu0 0.0
    %29 = vmatpush1.msra.mxu0 0.0
    %30 = vmatprep.subr.mxu0 0.0
    %31 = vmatpush1.msra.mxu0 0.0
    %32 = vmatprep.subr.mxu0 0.0
    %33 = vmatpush1.msra.mxu0 0.0
    %34 = vmatprep.subr.mxu0 0.0
    %35 = vmatpush1.msra.mxu0 0.0
    %36 = vmatprep.subr.mxu0 0.0
    %37 = vmatpush1.msra.mxu0 0.0
    %38 = vmatprep.subr.mxu0 0.0
    %39 = vmatpush1.msra.mxu0 0.0
    %40 = vmatprep.subr.mxu0 0.0
    %41 = vmatpush1.msra.mxu0 0.0
    %42 = vmatprep.subr.mxu0 0.0
    %43 = vmatpush1.msra.mxu0 0.0
    %44 = vmatprep.subr.mxu0 0.0
    %45 = vmatpush1.msra.mxu0 0.0
    %46 = vmatprep.subr.mxu0 0.0
    %47 = vmatpush1.msra.mxu0 0.0
    %48 = vmatprep.subr.mxu0 0.0
    %49 = vmatpush1.msra.mxu0 0.0
    %50 = vmatprep.subr.mxu0 0.0
    %51 = vmatpush1.msra.mxu0 0.0
    %52 = vmatprep.subr.mxu0 0.0
    %53 = vmatpush1.msra.mxu0 0.0
    %54 = vmatprep.subr.mxu0 0.0
    %55 = vmatpush1.msra.mxu0 0.0
    %56 = vmatprep.subr.mxu0 0.0
    %57 = vmatpush1.msra.mxu0 %v24
    %58 = vmatprep.subr.mxu0 0.0
    %59 = vmatpush2.msra.mxu0 0.0
    %60 = vmatprep.subr.mxu0 0.0
    %61 = vmatpush2.msra.mxu0 0.0
    %62 = vmatprep.subr.mxu0 0.0
    %63 = vmatpush2.msra.mxu0 0.0
    %64 = vmatprep.subr.mxu0 0.0
    %65 = vmatpush2.msra.mxu0 0.0
    %66 = vmatprep.subr.mxu0 0.0
    %67 = vmatpush2.msra.mxu0 0.0
    %68 = vmatprep.subr.mxu0 0.0
    %69 = vmatpush2.msra.mxu0 0.0
    %70 = vmatprep.subr.mxu0 0.0
    %71 = vmatpush2.msra.mxu0 0.0
    %72 = vmatprep.subr.mxu0 0.0
    %73 = vmatpush2.msra.mxu0 0.0
    %74 = vmatprep.subr.mxu0 0.0
    %75 = vmatpush2.msra.mxu0 0.0
    %76 = vmatprep.subr.mxu0 0.0
    %77 = vmatpush2.msra.mxu0 0.0
    %78 = vmatprep.subr.mxu0 0.0
    %79 = vmatpush2.msra.mxu0 0.0
    %80 = vmatprep.subr.mxu0 0.0
    %81 = vmatpush2.msra.mxu0 0.0
    %82 = vmatprep.subr.mxu0 0.0
    %83 = vmatpush2.msra.mxu0 0.0
    %84 = vmatprep.subr.mxu0 0.0
    %85 = vmatpush2.msra.mxu0 0.0
    %86 = vmatprep.subr.mxu0 0.0
    %87 = vmatpush2.msra.mxu0 0.0
    %88 = vmatprep.subr.mxu0 0.0
    %89 = vmatpush2.msra.mxu0 0.0
    %90 = vmatprep.mubr.f32.mxu0 0.0
    %91 = vmatmul.mubr.f32.gmra.mxu0 %v20
    %v92 = vpop.f32.mrf.mxu0
    %v93 = vadd.f32 0.0, %v92
    %v94 = vpop.f32.mrf.mxu0
    %95 = vdwg.mxu0
    %v96 = vtanh.pop %v93
    %v97 = vmul.f32 %v96, %v96
    %98 = vmatprep.subr.mxu0 0.0
    %99 = vmatpush1.xpose.msra.mxu0 0.0
    %100 = vmatprep.subr.mxu0 0.0
    %101 = vmatpush1.xpose.msra.mxu0 0.0
    %102 = vmatprep.subr.mxu0 0.0
    %103 = vmatpush1.xpose.msra.mxu0 0.0
    %104 = vmatprep.subr.mxu0 0.0
    %105 = vmatpush1.xpose.msra.mxu0 0.0
    %106 = vmatprep.subr.mxu0 0.0
    %107 = vmatpush1.xpose.msra.mxu0 0.0
    %108 = vmatprep.subr.mxu0 0.0
    %109 = vmatpush1.xpose.msra.mxu0 0.0
    %110 = vmatprep.subr.mxu0 0.0
    %111 = vmatpush1.xpose.msra.mxu0 0.0
    %112 = vmatprep.subr.mxu0 0.0
    %113 = vmatpush1.xpose.msra.mxu0 0.0
    %114 = vmatprep.subr.mxu0 0.0
    %115 = vmatpush1.xpose.msra.mxu0 0.0
    %116 = vmatprep.subr.mxu0 0.0
    %117 = vmatpush1.xpose.msra.mxu0 0.0
    %118 = vmatprep.subr.mxu0 0.0
    %119 = vmatpush1.xpose.msra.mxu0 0.0
    %120 = vmatprep.subr.mxu0 0.0
    %121 = vmatpush1.xpose.msra.mxu0 0.0
    %122 = vmatprep.subr.mxu0 0.0
    %123 = vmatpush1.xpose.msra.mxu0 0.0
    %124 = vmatprep.subr.mxu0 0.0
    %125 = vmatpush1.xpose.msra.mxu0 0.0
    %126 = vmatprep.subr.mxu0 0.0
    %127 = vmatpush1.xpose.msra.mxu0 0.0
    %128 = vmatprep.subr.mxu0 0.0
    %129 = vmatpush1.xpose.msra.mxu0 %v97
    %130 = vmatprep.subr.mxu0 0.0
    %131 = vmatpush2.xpose.msra.mxu0 0.0
    %132 = vmatprep.subr.mxu0 0.0
    %133 = vmatpush2.xpose.msra.mxu0 0.0
    %134 = vmatprep.subr.mxu0 0.0
    %135 = vmatpush2.xpose.msra.mxu0 0.0
    %136 = vmatprep.subr.mxu0 0.0
    %137 = vmatpush2.xpose.msra.mxu0 0.0
    %138 = vmatprep.subr.mxu0 0.0
    %139 = vmatpush2.xpose.msra.mxu0 0.0
    %140 = vmatprep.subr.mxu0 0.0
    %141 = vmatpush2.xpose.msra.mxu0 0.0
    %142 = vmatprep.subr.mxu0 0.0
    %143 = vmatpush2.xpose.msra.mxu0 0.0
    %144 = vmatprep.subr.mxu0 0.0
    %145 = vmatpush2.xpose.msra.mxu0 0.0
    %146 = vmatprep.subr.mxu0 0.0
    %147 = vmatpush2.xpose.msra.mxu0 0.0
    %148 = vmatprep.subr.mxu0 0.0
    %149 = vmatpush2.xpose.msra.mxu0 0.0
    %150 = vmatprep.subr.mxu0 0.0
    %151 = vmatpush2.xpose.msra.mxu0 0.0
    %152 = vmatprep.subr.mxu0 0.0
    %153 = vmatpush2.xpose.msra.mxu0 0.0
    %154 = vmatprep.subr.mxu0 0.0
    %155 = vmatpush2.xpose.msra.mxu0 0.0
    %156 = vmatprep.subr.mxu0 0.0
    %157 = vmatpush2.xpose.msra.mxu0 0.0
    %158 = vmatprep.subr.mxu0 0.0
    %159 = vmatpush2.xpose.msra.mxu0 0.0
    %160 = vmatprep.subr.mxu0 0.0
    %161 = vmatpush2.xpose.msra.mxu0 0.0
    %162 = vmatprep.mubr.f32.mxu0 0.0
    %163 = vmatmul.mubr.f32.gmra.mxu0 %v17
    %v164 = vpop.f32.mrf.mxu0
    %v165 = vadd.f32 0.0, %v164
    %v166 = vpop.f32.mrf.mxu0
    %167 = vdwg.mxu0
    %vm168 = vcmask 57344
    %169 = vst.msk [vmem:[#allocation2] sm:$0x1] %vm168, %v165
    // Predicated region
    $region14: #{forward.1} parent=1 // pred_check
      _
    $region15: #{forward.1} parent=1 // pred_check_branch
      %171 = sbr.rel (0) target = $region17
    $region16: #{forward.1} parent=1 // pred_region
      %s173 = ssub.s32 16, 16
      %174 = vsyncadd [#allocation3], %s173
      %s176 = sshll.u32 [#allocation2], 4
      %s177 = int_to_ptr.vmem [resolvable:$true] %s176
      %179 = dma.vmem_to_hbm [thread:$0]  %s177, 16, %s3, [#allocation3]
    $region17: #{forward.1} parent=1 // pred_fallthru
      _
    // Predicated region
    $region18: #{forward.1} parent=1 // pred_check
      _
    $region19: #{forward.1} parent=1 // pred_check_branch
      %181 = sbr.rel (0) target = $region21
    $region20: #{forward.1} parent=1 // pred_region
      %182 = dma.done [#allocation3], 16
    $region21: #{forward.1} parent=1 // pred_fallthru
      _
    %183 = vsyncpa [#allocation3], 1

</llo_original>
